<compile_context>
chip_gen: v6e
topology: v6e:2x2x1
jax: 0.10.0
libtpu: 0.0.40
codegen_flags: <defaults>
</compile_context>

<pallas_src>
import functools

import jax
import jax.numpy as jnp
from jax.experimental import pallas as pl
from jax.experimental.pallas import tpu as pltpu

NPAD = 128                       # padded output / weight-N width (one lane group)
_VMEM_LIMIT = 32 * 1024 * 1024   # scoped-VMEM limit we request (safe on v5e/v6e/v7x)
_VMEM_BUDGET = 30 * 1024 * 1024  # what we allow our buffers to use (headroom left)


def _round_up(x, m):
    return ((x + m - 1) // m) * m


def _sublane_multiple(dtype):
    # f32 -> 8, bf16 -> 16, int8/fp8 -> 32 (sub-32-bit dtypes pack along sublanes).
    return max(8, 32 // jnp.dtype(dtype).itemsize)


def _cls_head_kernel(x_ref, w_ref, b_ref, o_ref):
    # Linear layer: x @ W_pad + b_pad on a lane-dense [TB, 128] output tile.
    x = x_ref[...]                                            # [TB, H]
    w = w_ref[...]                                            # [H, NPAD]
    acc = jnp.dot(x, w, preferred_element_type=jnp.float32)   # [TB, NPAD] f32
    o_ref[...] = (acc + b_ref[...]).astype(o_ref.dtype)       # bias add in f32


def prepare_params(weight, bias, compute_dtype=None):
    """One-time param prep (hoisted out of the per-call path).

    weight: [2, H] (PyTorch nn.Linear layout), bias: [2].
    Returns w_pad: [H, NPAD] (zero beyond col 2), b_pad: [1, NPAD] f32.
    Pass compute_dtype=jnp.bfloat16 to get a bf16 weight for the bf16 path.
    """
    out_features, H = weight.shape
    assert out_features == 2
    w_dtype = compute_dtype if compute_dtype is not None else weight.dtype
    w_pad = jnp.zeros((H, NPAD), dtype=w_dtype)
    w_pad = w_pad.at[:, :out_features].set(weight.T.astype(w_dtype))
    b_pad = jnp.zeros((1, NPAD), dtype=jnp.float32)
    b_pad = b_pad.at[:, :out_features].set(bias.astype(jnp.float32))
    return w_pad, b_pad


def _pick_tb(B, H, x_dtype, w_dtype, out_dtype, block_b):
    """Batch-tile size: dtype-aware sublane rounding, >=2 grid steps when
    possible (megacore), clamped to the VMEM budget (double-buffered tiles)."""
    sub = _sublane_multiple(x_dtype)
    if block_b is None:
        block_b = 4096 if jnp.dtype(x_dtype).itemsize <= 2 else 2048
    tb = min(
        block_b,
        _round_up(B, sub),                            # never bigger than needed
        max(sub, _round_up(pl.cdiv(B, 2), sub)),      # >=2 steps for megacore
    )
    # VMEM: 2x x-tile + 2x out-tile (double-buffered) + 2x resident weight + bias.
    isx = jnp.dtype(x_dtype).itemsize
    iso = jnp.dtype(out_dtype).itemsize
    isw = jnp.dtype(w_dtype).itemsize
    fixed = 2 * H * NPAD * isw + 2 * NPAD * 4
    per_row = 2 * H * isx + 2 * NPAD * iso
    tb_vmem = max(sub, ((_VMEM_BUDGET - fixed) // per_row) // sub * sub)
    return max(sub, min(tb, tb_vmem))


@functools.partial(jax.jit, static_argnames=("block_b",))
def classification_head(x, w_pad, b_pad, block_b=None):
    """x: [B, H]; w_pad: [H, NPAD]; b_pad: [1, NPAD] f32. Returns [B, 2] in x.dtype."""
    B, H = x.shape
    out_dtype = x.dtype
    TB = _pick_tb(B, H, x.dtype, w_pad.dtype, out_dtype, block_b)
    grid = pl.cdiv(B, TB)  # ragged last block handled by masked partial DMA

    out_padded = pl.pallas_call(
        _cls_head_kernel,
        out_shape=jax.ShapeDtypeStruct((B, NPAD), out_dtype),
        grid_spec=pltpu.PrefetchScalarGridSpec(
            num_scalar_prefetch=0,
            grid=(grid,),
            in_specs=[
                pl.BlockSpec((TB, H), lambda i: (i, 0)),      # x tile (pipelined)
                pl.BlockSpec((H, NPAD), lambda i: (0, 0)),    # full weight, resident
                pl.BlockSpec((1, NPAD), lambda i: (0, 0)),    # padded bias, resident
            ],
            out_specs=pl.BlockSpec((TB, NPAD), lambda i: (i, 0)),
        ),
        compiler_params=pltpu.CompilerParams(
            dimension_semantics=("parallel",),                # megacore batch sharding
            vmem_limit_bytes=_VMEM_LIMIT,
        ),
    )(x, w_pad, b_pad)

    # Padded weight/bias columns are zero, so cols 2..127 are exactly bias-pad=0;
    # slice them off (padded rows never exist: out_shape is exactly B rows).
    return out_padded[:, :2]


if __name__ == "__main__":
    key = jax.random.PRNGKey(0)
    k_x, k_w, k_b = jax.random.split(key, 3)

    hidden = 32                          # SMALL shape consistent with the module
    bound = 1.0 / (hidden ** 0.5)
    weight = jax.random.uniform(k_w, (2, hidden), minval=-bound, maxval=bound,
                                dtype=jnp.float32)
    bias = jax.random.uniform(k_b, (2,), minval=-bound, maxval=bound,
                              dtype=jnp.float32)

    # ---- f32 path (matches nn.Linear numerics) -------------------------------
    w_pad, b_pad = prepare_params(weight, bias)
    for batch in (8, 20):                # exact grid, and a ragged last block
        x = jax.random.normal(k_x, (batch, hidden), dtype=jnp.float32)
        out = classification_head(x, w_pad, b_pad)
        jax.block_until_ready(out)
        ref = x @ weight.T + bias        # eval-mode dropout = identity
        assert out.shape == (batch, 2)
        assert jnp.allclose(out, ref, atol=1e-5, rtol=1e-5)

    # ---- bf16 activation path (half the HBM read bytes; f32 accumulation) ----
    w_pad_bf16, b_pad_f32 = prepare_params(weight, bias, compute_dtype=jnp.bfloat16)
    batch = 24
    x = jax.random.normal(k_x, (batch, hidden), dtype=jnp.float32)
    out_bf16 = classification_head(x.astype(jnp.bfloat16), w_pad_bf16, b_pad_f32)
    jax.block_until_ready(out_bf16)
    ref_bf16 = (x.astype(jnp.bfloat16).astype(jnp.float32)
                @ weight.T.astype(jnp.bfloat16).astype(jnp.float32) + bias)
    assert out_bf16.shape == (batch, 2)
    assert out_bf16.dtype == jnp.bfloat16
    assert jnp.allclose(out_bf16.astype(jnp.float32), ref_bf16, atol=5e-2, rtol=5e-2)

    print("KERNEL_OK")
</pallas_src>

<mosaic_0001>
module attributes {stable_mosaic.version = 11 : i64} {
  func.func @_cls_head_kernel(%arg0: i32, %arg1: memref<8x32xf32, #tpu.memory_space<vmem>>, %arg2: memref<32x128xf32, #tpu.memory_space<vmem>>, %arg3: memref<1x128xf32, #tpu.memory_space<vmem>>, %arg4: memref<8x128xf32, #tpu.memory_space<vmem>>) attributes {dimension_semantics = [#tpu.dimension_semantics<parallel>], iteration_bounds = array<i64: 1>, scalar_prefetch = 0 : i64, scratch_operands = 0 : i64, tpu.core_type = #tpu.core_type<tc>, window_params = [{transform_indices = @transform_0, window_bounds = array<i64: 8, 32>}, {pipeline_mode = #tpu.pipeline_mode<synchronous>, transform_indices = @transform_1, window_bounds = array<i64: 32, 128>}, {pipeline_mode = #tpu.pipeline_mode<synchronous>, transform_indices = @transform_2, window_bounds = array<i64: 1, 128>}, {transform_indices = @transform_3, window_bounds = array<i64: 8, 128>}]} {
    %c0 = arith.constant 0 : index
    %c0_0 = arith.constant 0 : index
    %0 = vector.load %arg1[%c0, %c0_0] : memref<8x32xf32, #tpu.memory_space<vmem>>, vector<8x32xf32>
    %c0_1 = arith.constant 0 : index
    %c0_2 = arith.constant 0 : index
    %1 = vector.load %arg2[%c0_1, %c0_2] : memref<32x128xf32, #tpu.memory_space<vmem>>, vector<32x128xf32>
    %cst = arith.constant dense<0.000000e+00> : vector<8x128xf32>
    %2 = tpu.matmul %0, %1, %cst {dimension_numbers = #tpu.dot_dimension_numbers<[1], [0], [0], [1], [0, 0, 1, 1], [], []>} : vector<8x32xf32>, vector<32x128xf32>, vector<8x128xf32> -> vector<8x128xf32>
    %c0_3 = arith.constant 0 : index
    %c0_4 = arith.constant 0 : index
    %3 = vector.load %arg3[%c0_3, %c0_4] : memref<1x128xf32, #tpu.memory_space<vmem>>, vector<1x128xf32>
    %4 = vector.broadcast %3 : vector<1x128xf32> to vector<8x128xf32>
    %5 = arith.addf %2, %4 : vector<8x128xf32>
    %c0_5 = arith.constant 0 : index
    %c0_6 = arith.constant 0 : index
    %6 = vector.load %arg4[%c0_5, %c0_6] : memref<8x128xf32, #tpu.memory_space<vmem>>, vector<8x128xf32>
    tpu.vector_store %arg4[%c0_5, %c0_6], %5 {strides = array<i32>} : memref<8x128xf32, #tpu.memory_space<vmem>>, vector<8x128xf32>,
    return
  }
  func.func @transform_0(%arg0: i32) -> (i32, i32) {
    %c0_i32 = arith.constant 0 : i32
    %c0_i32_0 = arith.constant 0 : i32
    return %arg0, %c0_i32 : i32, i32
  }
  func.func @transform_1(%arg0: i32) -> (i32, i32) {
    %c0_i32 = arith.constant 0 : i32
    %c0_i32_0 = arith.constant 0 : i32
    %c0_i32_1 = arith.constant 0 : i32
    return %c0_i32, %c0_i32_0 : i32, i32
  }
  func.func @transform_2(%arg0: i32) -> (i32, i32) {
    %c0_i32 = arith.constant 0 : i32
    %c0_i32_0 = arith.constant 0 : i32
    %c0_i32_1 = arith.constant 0 : i32
    return %c0_i32, %c0_i32_0 : i32, i32
  }
  func.func @transform_3(%arg0: i32) -> (i32, i32) {
    %c0_i32 = arith.constant 0 : i32
    %c0_i32_0 = arith.constant 0 : i32
    return %arg0, %c0_i32 : i32, i32
  }
}

</mosaic_0001>

<llo_original>
// kernel: classification_head.1
$region0: #{classification_head.1}
  #allocation0 [shape = 'u32[]', space=smem, size = 0x4, offset = 0x4, fixed_abs, tag = 'smem constant byte address 0x4 - core index']
  #allocation1 [shape = 'u32[144,128]{1,0:T(1,128)}', space=vmem, size = 0x12000, scoped, tag = 'internal scratch']
  %s0 = inlined_call_operand.hbm [shape: f32[8,32], index: 0, kind: input, shape index: {}]
  %s1 = inlined_call_operand.hbm [shape: f32[32,128], index: 1, kind: input, shape index: {}]
  %s2 = inlined_call_operand.vmem [shape: f32[1,128], index: 2, kind: input, shape index: {}]
  %s3 = inlined_call_operand.vmem [shape: f32[8,128], index: 3, kind: output, shape index: {}]
  %s4 = sld [smem:[#allocation0]]
  $region30: #{classification_head.1} parent=0
    _
  %s6 = ssub.s32 1, %s4
  %s7 = scalar_select 0, %s6, %s4
  $region1: #{classification_head.1} parent=0
    #allocation2 [shape = 'u8[4096]{0}', space=vmem, size = 0x1000, scoped, tag = 'input window, operand 0, single buffered']
    #allocation3 [shape = 's32[1]{0}', space=sflag, size = 0x4, scoped, tag = 'scoped memory for classification_head.1']
    #allocation4 [shape = 'u8[16384]{0}', space=vmem, size = 0x4000, scoped, tag = 'input window, operand 1, single buffered']
    #allocation5 [shape = 's32[1]{0}', space=sflag, size = 0x4, scoped, tag = 'scoped memory for classification_head.1']
    %8 = vsyncpa [#allocation3], 0
    %9 = vsyncpa [#allocation5], 0
    // Predicated region
    $region2: #{classification_head.1} parent=1 // pred_check
      _
    $region3: #{classification_head.1} parent=1 // pred_check_branch
      %11 = sbr.rel (0) target = $region5
    $region4: #{classification_head.1} parent=1 // pred_region
      %s13 = ssub.s32 128, 128
      %14 = vsyncadd [#allocation3], %s13
      %s16 = sshll.u32 [#allocation2], 4
      %s17 = int_to_ptr.vmem [resolvable:$true] %s16
      %19 = dma.hbm_to_vmem [thread:$0]  %s0, 128, %s17, [#allocation3]
    $region5: #{classification_head.1} parent=1 // pred_fallthru
      _
    // Predicated region
    $region6: #{classification_head.1} parent=1 // pred_check
      _
    $region7: #{classification_head.1} parent=1 // pred_check_branch
      %21 = sbr.rel (0) target = $region9
    $region8: #{classification_head.1} parent=1 // pred_region
      %s23 = ssub.s32 512, 512
      %24 = vsyncadd [#allocation5], %s23
      %s25 = sshll.u32 [#allocation4], 4
      %s26 = int_to_ptr.vmem [resolvable:$true] %s25
      %31 = dma.hbm_to_vmem [thread:$0]  %s1, 512, %s26, [#allocation5], 128, 128, 8
    $region9: #{classification_head.1} parent=1 // pred_fallthru
      _
    // Predicated region
    $region10: #{classification_head.1} parent=1 // pred_check
      _
    $region11: #{classification_head.1} parent=1 // pred_check_branch
      %33 = sbr.rel (0) target = $region13
    $region12: #{classification_head.1} parent=1 // pred_region
      _
    $region13: #{classification_head.1} parent=1 // pred_fallthru
      _
    // Predicated region
    $region14: #{classification_head.1} parent=1 // pred_check
      _
    $region15: #{classification_head.1} parent=1 // pred_check_branch
      %35 = sbr.rel (0) target = $region17
    $region16: #{classification_head.1} parent=1 // pred_region
      %36 = dma.done [#allocation3], 128
    $region17: #{classification_head.1} parent=1 // pred_fallthru
      _
    // Predicated region
    $region18: #{classification_head.1} parent=1 // pred_check
      _
    $region19: #{classification_head.1} parent=1 // pred_check_branch
      %38 = sbr.rel (0) target = $region21
    $region20: #{classification_head.1} parent=1 // pred_region
      %39 = dma.done [#allocation5], 512
    $region21: #{classification_head.1} parent=1 // pred_fallthru
      _
    %v40 = vld [vmem:[#allocation2] sm:$0xff]
    %v41 = vld [vmem:[#allocation4] sm:$0xff]
    %v42 = vld [vmem:[#allocation4 + $0x8] sm:$0xff]
    %v43 = vld [vmem:[#allocation4 + $0x10] sm:$0xff]
    %v44 = vld [vmem:[#allocation4 + $0x18] sm:$0xff]
    %v45 = vld [vmem:[%s2] sm:$0x1]
    %v47 = vlaneseq
    %v48 = vshrl.u32 %v47, 7
    %v49 = vsub.s32 0, %v48
    %v50 = vrot.slane %v45, %v49
    %vm52 = vcmask 261120
    %v54 = vsel %vm52, %v40, 0
    %56 = vmatprep.subr.mxu0 0.0
    %57 = vmatpush1.msra.mxu0 0.0
    %58 = vmatprep.subr.mxu0 0.0
    %59 = vmatpush1.msra.mxu0 0.0
    %60 = vmatprep.subr.mxu0 0.0
    %61 = vmatpush1.msra.mxu0 0.0
    %62 = vmatprep.subr.mxu0 0.0
    %63 = vmatpush1.msra.mxu0 0.0
    %64 = vmatprep.subr.mxu0 0.0
    %65 = vmatpush1.msra.mxu0 0.0
    %66 = vmatprep.subr.mxu0 0.0
    %67 = vmatpush1.msra.mxu0 0.0
    %68 = vmatprep.subr.mxu0 0.0
    %69 = vmatpush1.msra.mxu0 0.0
    %70 = vmatprep.subr.mxu0 0.0
    %71 = vmatpush1.msra.mxu0 0.0
    %72 = vmatprep.subr.mxu0 0.0
    %73 = vmatpush1.msra.mxu0 0.0
    %74 = vmatprep.subr.mxu0 0.0
    %75 = vmatpush1.msra.mxu0 0.0
    %76 = vmatprep.subr.mxu0 0.0
    %77 = vmatpush1.msra.mxu0 0.0
    %78 = vmatprep.subr.mxu0 0.0
    %79 = vmatpush1.msra.mxu0 0.0
    %80 = vmatprep.subr.mxu0 0.0
    %81 = vmatpush1.msra.mxu0 %v44
    %82 = vmatprep.subr.mxu0 0.0
    %83 = vmatpush1.msra.mxu0 %v43
    %84 = vmatprep.subr.mxu0 0.0
    %85 = vmatpush1.msra.mxu0 %v42
    %86 = vmatprep.subr.mxu0 0.0
    %87 = vmatpush1.msra.mxu0 %v41
    %88 = vmatprep.subr.mxu0 0.0
    %89 = vmatpush2.msra.mxu0 0.0
    %90 = vmatprep.subr.mxu0 0.0
    %91 = vmatpush2.msra.mxu0 0.0
    %92 = vmatprep.subr.mxu0 0.0
    %93 = vmatpush2.msra.mxu0 0.0
    %94 = vmatprep.subr.mxu0 0.0
    %95 = vmatpush2.msra.mxu0 0.0
    %96 = vmatprep.subr.mxu0 0.0
    %97 = vmatpush2.msra.mxu0 0.0
    %98 = vmatprep.subr.mxu0 0.0
    %99 = vmatpush2.msra.mxu0 0.0
    %100 = vmatprep.subr.mxu0 0.0
    %101 = vmatpush2.msra.mxu0 0.0
    %102 = vmatprep.subr.mxu0 0.0
    %103 = vmatpush2.msra.mxu0 0.0
    %104 = vmatprep.subr.mxu0 0.0
    %105 = vmatpush2.msra.mxu0 0.0
    %106 = vmatprep.subr.mxu0 0.0
    %107 = vmatpush2.msra.mxu0 0.0
    %108 = vmatprep.subr.mxu0 0.0
    %109 = vmatpush2.msra.mxu0 0.0
    %110 = vmatprep.subr.mxu0 0.0
    %111 = vmatpush2.msra.mxu0 0.0
    %112 = vmatprep.subr.mxu0 0.0
    %113 = vmatpush2.msra.mxu0 0.0
    %114 = vmatprep.subr.mxu0 0.0
    %115 = vmatpush2.msra.mxu0 0.0
    %116 = vmatprep.subr.mxu0 0.0
    %117 = vmatpush2.msra.mxu0 0.0
    %118 = vmatprep.subr.mxu0 0.0
    %119 = vmatpush2.msra.mxu0 0.0
    %120 = vmatprep.mubr.f32.mxu0 0.0
    %121 = vmatmul.mubr.f32.gmra.mxu0 %v54
    %v122 = vpop.f32.mrf.mxu0
    %v123 = vadd.f32 %v50, %v122
    %v124 = vpop.f32.mrf.mxu0
    %125 = vdwg.mxu0
    %126 = vst [vmem:[%s3] sm:$0xff] %v123
    // Predicated region
    $region22: #{classification_head.1} parent=1 // pred_check
      _
    $region23: #{classification_head.1} parent=1 // pred_check_branch
      %128 = sbr.rel (0) target = $region25
    $region24: #{classification_head.1} parent=1 // pred_region
      _
    $region25: #{classification_head.1} parent=1 // pred_fallthru
      _
    // Predicated region
    $region26: #{classification_head.1} parent=1 // pred_check
      _
    $region27: #{classification_head.1} parent=1 // pred_check_branch
      %130 = sbr.rel (0) target = $region29
    $region28: #{classification_head.1} parent=1 // pred_region
      _
    $region29: #{classification_head.1} parent=1 // pred_fallthru
      _
    %131 = vsyncpa [#allocation3], 1
    %132 = vsyncpa [#allocation5], 1

</llo_original>
